<compile_context>
chip_gen: v6e
topology: v6e:2x2x1
jax: 0.10.0
libtpu: 0.0.40
codegen_flags: <defaults>
</compile_context>

<pallas_src>
import functools

import jax
import jax.numpy as jnp
from jax.experimental import pallas as pl
from jax.experimental.pallas import tpu as pltpu

_MAX_ITERATIVE_K = 128       # beyond this, dispatch to sort-based lax.top_k
_SIGN_MASK_LO = 0x7FFFFFFF   # low-31-bit mask for the order-preserving key
_HI16_MASK = -65536          # 0xFFFF0000 as int32
_NEG_HI_FLIP = 0x7FFF0000    # decode mask for the packed (bf16) key


def _kmax_kernel(x_ref, o_ref, *, sr, packed):
    """x_ref: (TM, T) input tile; o_ref: (TM, K) top-K per row, descending."""
    TM, T = x_ref.shape
    K = o_ref.shape[1]
    n_strips = TM // sr

    sentinel = jnp.int32(-2 ** 31)
    sign_mask = jnp.int32(_SIGN_MASK_LO)
    hi_mask = jnp.int32(_HI16_MASK)
    # Row-constant reversed lane index: keep it as a single (1, T) row and
    # rely on broadcasting where it is used (no (TM, T) materialization).
    rev = jnp.int32(T - 1) - jax.lax.broadcasted_iota(jnp.int32, (1, T), 1)

    def strip(s, carry):
        r0 = pl.multiple_of(s * sr, sr)
        x = x_ref[pl.ds(r0, sr), :].astype(jnp.float32)        # (sr, T)
        bits = pltpu.bitcast(x, jnp.int32)
        # Order-preserving f32 -> int32 key: flip low 31 bits of negatives.
        # Integer order == float order; INT32_MIN is a safe "removed"
        # sentinel even when -inf is a legitimate input.
        key = jnp.where(bits < 0, bits ^ sign_mask, bits)

        cols = []
        if packed:
            # bf16 path: the f32 bits of an upcast bf16 have zero low 16
            # bits, so the value's order key lives entirely in the high 16
            # bits.  Pack the reversed lane index into the low 16 bits: one
            # reduce per round finds both the max value and its leftmost
            # occurrence (unique per row -> correct duplicate multiplicity).
            pkey = (key & hi_mask) | rev
            for j in range(K):
                kmax = jnp.max(pkey, axis=1, keepdims=True)    # (sr, 1)
                cols.append(kmax)
                if j + 1 < K:
                    pkey = jnp.where(pkey == kmax, sentinel, pkey)
            out = jnp.concatenate(cols, axis=1) & hi_mask      # (sr, K)
            obits = jnp.where(out < 0, out ^ jnp.int32(_NEG_HI_FLIP), out)
        else:
            # f32/f16 path: exact 32-bit value key; two reduces per round
            # (max, then leftmost occurrence of that max so duplicated
            # values are reported the correct number of times).
            for j in range(K):
                kmax = jnp.max(key, axis=1, keepdims=True)     # (sr, 1)
                cols.append(kmax)
                if j + 1 < K:
                    hit = jnp.max(
                        jnp.where(key == kmax, rev, jnp.int32(-1)),
                        axis=1, keepdims=True)                 # (sr, 1)
                    key = jnp.where(rev == hit, sentinel, key)
            out = jnp.concatenate(cols, axis=1)                # (sr, K)
            obits = jnp.where(out < 0, out ^ sign_mask, out)

        # Single store per strip (no per-round output traffic).
        o_ref[pl.ds(r0, sr), :] = pltpu.bitcast(
            obits, jnp.float32).astype(o_ref.dtype)
        return carry

    jax.lax.fori_loop(0, n_strips, strip, 0)


def _choose_strip_rows(T):
    # Size the strip so its int32 key (sr * T * 4 B) stays within ~16 vregs:
    # all K selection rounds then run register-resident instead of
    # re-loading/re-storing the key from VMEM every round.
    sr = (16 * 1024) // max(1, T)
    return max(8, min(64, (sr // 8) * 8))


def _choose_block_rows(M, T, itemsize, sr):
    # ~2 MiB input DMA tile: big enough to amortize the ~0.35 us per-grid-
    # step overhead, small enough (x2 for double buffering + tiny output
    # block) for v7x's 64 MiB VMEM and v5e's 16 MiB default scoped limit.
    # In-kernel intermediates are strip-sized, so they no longer scale with
    # the tile and need not be budgeted here.
    target_bytes = 2 * 1024 * 1024
    tm = target_bytes // max(1, T * itemsize)
    tm = max(sr, (tm // sr) * sr)
    # Keep >= ~4 grid steps when enough rows exist so the "parallel" axis
    # can shard across both TensorCores on v7x and the pipeline overlaps.
    cap = ((M + 3) // 4 + sr - 1) // sr * sr
    tm = min(tm, max(sr, cap))
    m_pad_sr = ((M + sr - 1) // sr) * sr
    return min(tm, m_pad_sr)


def kmax_pool(x, k=None, *, block_rows=None):
    """x: (B, C, T) -> (B, C, k) top-k values along dim 2 (descending)."""
    B, C, T = x.shape
    if k is None:
        k = T // 2
    k = int(k)
    if not (0 < k <= T):
        raise ValueError(f"k must be in (0, {T}], got {k}")

    if x.dtype not in (jnp.float32, jnp.bfloat16, jnp.float16) \
            or k > _MAX_ITERATIVE_K:
        # Non-float dtypes and very large k use XLA's sort-based top-k.
        return jax.lax.top_k(x, k)[0]

    packed = (x.dtype == jnp.bfloat16) and (T <= 65536)

    M = B * C
    x2 = x.reshape(M, T)
    itemsize = jnp.dtype(x.dtype).itemsize

    sr = _choose_strip_rows(T)
    sr = min(sr, ((M + 7) // 8) * 8)          # don't over-pad tiny inputs
    if block_rows is None:
        tm = _choose_block_rows(M, T, itemsize, sr)
    else:
        tm = max(sr, (int(block_rows) // sr) * sr)

    m_pad = int(pl.cdiv(M, tm)) * tm
    if m_pad != M:
        # Pad rows so (tm, T) blocks tile the array; padded rows (zeros)
        # are dropped after the call.
        x2 = jnp.pad(x2, ((0, m_pad - M), (0, 0)))

    kernel = functools.partial(_kmax_kernel, sr=sr, packed=packed)
    out2 = pl.pallas_call(
        kernel,
        out_shape=jax.ShapeDtypeStruct((m_pad, k), x.dtype),
        grid=(m_pad // tm,),
        in_specs=[pl.BlockSpec((tm, T), lambda i: (i, 0))],
        out_specs=pl.BlockSpec((tm, k), lambda i: (i, 0)),
        compiler_params=pltpu.CompilerParams(
            dimension_semantics=("parallel",),
            vmem_limit_bytes=32 * 1024 * 1024),
    )(x2)
    return out2[:M].reshape(B, C, k)


if __name__ == "__main__":
    key0 = jax.random.PRNGKey(0)
    k1, k2, k3, k4 = jax.random.split(key0, 4)

    # Test 1: module defaults (k = None -> T // 2), f32 NCW input.
    B, C, T = 2, 4, 16
    x = jax.random.normal(k1, (B, C, T), dtype=jnp.float32)
    y = jax.block_until_ready(kmax_pool(x))
    ref = jax.lax.top_k(x, T // 2)[0]
    assert y.shape == (B, C, T // 2), y.shape
    assert jnp.array_equal(y, ref), "mismatch vs reference top-k (test 1)"

    # Test 2: row tiling + row padding (M = 120 rows, 2 grid blocks of 64).
    B2, C2, T2, K2 = 3, 40, 128, 8
    x2 = jax.random.normal(k2, (B2, C2, T2), dtype=jnp.float32)
    y2 = jax.block_until_ready(kmax_pool(x2, k=K2, block_rows=64))
    ref2 = jax.lax.top_k(x2, K2)[0]
    assert y2.shape == (B2, C2, K2), y2.shape
    assert jnp.array_equal(y2, ref2), "mismatch vs reference top-k (test 2)"

    # Test 3: bf16 packed single-reduce path, module defaults.
    x3 = jax.random.normal(k3, (B, C, T)).astype(jnp.bfloat16)
    y3 = jax.block_until_ready(kmax_pool(x3))
    ref3 = jax.lax.top_k(x3, T // 2)[0]
    assert y3.shape == (B, C, T // 2), y3.shape
    assert jnp.array_equal(y3, ref3), "mismatch vs reference top-k (test 3)"

    # Test 4: default k = T // 2 past the old k<=16 cutoff (k = 32 rounds).
    B4, C4, T4 = 2, 3, 64
    x4 = jax.random.normal(k4, (B4, C4, T4), dtype=jnp.float32)
    y4 = jax.block_until_ready(kmax_pool(x4))
    ref4 = jax.lax.top_k(x4, T4 // 2)[0]
    assert y4.shape == (B4, C4, T4 // 2), y4.shape
    assert jnp.array_equal(y4, ref4), "mismatch vs reference top-k (test 4)"

    print("KERNEL_OK")
</pallas_src>

<mosaic_0001>
module attributes {stable_mosaic.version = 11 : i64} {
  func.func @_kmax_kernel(%arg0: i32, %arg1: memref<8x16xf32, #tpu.memory_space<vmem>>, %arg2: memref<8x8xf32, #tpu.memory_space<vmem>>) attributes {dimension_semantics = [#tpu.dimension_semantics<parallel>], iteration_bounds = array<i64: 1>, scalar_prefetch = 0 : i64, scratch_operands = 0 : i64, tpu.core_type = #tpu.core_type<tc>, window_params = [{transform_indices = @transform_0, window_bounds = array<i64: 8, 16>}, {transform_indices = @transform_1, window_bounds = array<i64: 8, 8>}]} {
    %0 = tpu.iota {dimensions = array<i32: 1>} : vector<1x16xi32>
    %c15_i32 = arith.constant 15 : i32
    %1 = vector.broadcast %c15_i32 : i32 to vector<1x16xi32>
    %2 = arith.subi %1, %0 : vector<1x16xi32>
    %c2147483647_i32 = arith.constant 2147483647 : i32
    %c-2147483648_i32 = arith.constant -2147483648 : i32
    %c0_i32 = arith.constant 0 : i32
    %c8_i32 = arith.constant 8 : i32
    %3 = arith.muli %c0_i32, %c8_i32 : i32
    %4 = tpu.assume_multiple %3, 8 : i32
    %5 = arith.index_cast %4 : i32 to index
    %c0 = arith.constant 0 : index
    %6 = vector.load %arg1[%5, %c0] : memref<8x16xf32, #tpu.memory_space<vmem>>, vector<8x16xf32>
    %7 = tpu.bitcast %6 : vector<8x16xf32> -> vector<8x16xi32>
    %c0_i32_0 = arith.constant 0 : i32
    %8 = vector.broadcast %c0_i32_0 : i32 to vector<8x16xi32>
    %9 = arith.cmpi slt, %7, %8 : vector<8x16xi32>
    %10 = vector.broadcast %c2147483647_i32 : i32 to vector<8x16xi32>
    %11 = arith.xori %7, %10 : vector<8x16xi32>
    %12 = arith.select %9, %11, %7 : vector<8x16xi1>, vector<8x16xi32>
    %cst = arith.constant dense<-2147483648> : vector<8xi32>
    %13 = vector.multi_reduction <maxsi>, %12, %cst [1] : vector<8x16xi32> to vector<8xi32>
    %14 = vector.shape_cast %13 : vector<8xi32> to vector<8x1xi32>
    %15 = vector.broadcast %14 : vector<8x1xi32> to vector<8x16xi32>
    %16 = arith.cmpi eq, %12, %15 : vector<8x16xi32>
    %c-1_i32 = arith.constant -1 : i32
    %17 = vector.shape_cast %2 : vector<1x16xi32> to vector<1x16xi32>
    %18 = vector.broadcast %17 : vector<1x16xi32> to vector<8x16xi32>
    %19 = vector.broadcast %c-1_i32 : i32 to vector<8x16xi32>
    %20 = arith.select %16, %18, %19 : vector<8x16xi1>, vector<8x16xi32>
    %cst_1 = arith.constant dense<-2147483648> : vector<8xi32>
    %21 = vector.multi_reduction <maxsi>, %20, %cst_1 [1] : vector<8x16xi32> to vector<8xi32>
    %22 = vector.shape_cast %21 : vector<8xi32> to vector<8x1xi32>
    %23 = vector.broadcast %2 : vector<1x16xi32> to vector<8x16xi32>
    %24 = vector.broadcast %22 : vector<8x1xi32> to vector<8x16xi32>
    %25 = arith.cmpi eq, %23, %24 : vector<8x16xi32>
    %26 = vector.broadcast %c-2147483648_i32 : i32 to vector<8x16xi32>
    %27 = arith.select %25, %26, %12 : vector<8x16xi1>, vector<8x16xi32>
    %cst_2 = arith.constant dense<-2147483648> : vector<8xi32>
    %28 = vector.multi_reduction <maxsi>, %27, %cst_2 [1] : vector<8x16xi32> to vector<8xi32>
    %29 = vector.shape_cast %28 : vector<8xi32> to vector<8x1xi32>
    %30 = vector.broadcast %29 : vector<8x1xi32> to vector<8x16xi32>
    %31 = arith.cmpi eq, %27, %30 : vector<8x16xi32>
    %c-1_i32_3 = arith.constant -1 : i32
    %32 = vector.shape_cast %2 : vector<1x16xi32> to vector<1x16xi32>
    %33 = vector.broadcast %32 : vector<1x16xi32> to vector<8x16xi32>
    %34 = vector.broadcast %c-1_i32_3 : i32 to vector<8x16xi32>
    %35 = arith.select %31, %33, %34 : vector<8x16xi1>, vector<8x16xi32>
    %cst_4 = arith.constant dense<-2147483648> : vector<8xi32>
    %36 = vector.multi_reduction <maxsi>, %35, %cst_4 [1] : vector<8x16xi32> to vector<8xi32>
    %37 = vector.shape_cast %36 : vector<8xi32> to vector<8x1xi32>
    %38 = vector.broadcast %2 : vector<1x16xi32> to vector<8x16xi32>
    %39 = vector.broadcast %37 : vector<8x1xi32> to vector<8x16xi32>
    %40 = arith.cmpi eq, %38, %39 : vector<8x16xi32>
    %41 = vector.broadcast %c-2147483648_i32 : i32 to vector<8x16xi32>
    %42 = arith.select %40, %41, %27 : vector<8x16xi1>, vector<8x16xi32>
    %cst_5 = arith.constant dense<-2147483648> : vector<8xi32>
    %43 = vector.multi_reduction <maxsi>, %42, %cst_5 [1] : vector<8x16xi32> to vector<8xi32>
    %44 = vector.shape_cast %43 : vector<8xi32> to vector<8x1xi32>
    %45 = vector.broadcast %44 : vector<8x1xi32> to vector<8x16xi32>
    %46 = arith.cmpi eq, %42, %45 : vector<8x16xi32>
    %c-1_i32_6 = arith.constant -1 : i32
    %47 = vector.shape_cast %2 : vector<1x16xi32> to vector<1x16xi32>
    %48 = vector.broadcast %47 : vector<1x16xi32> to vector<8x16xi32>
    %49 = vector.broadcast %c-1_i32_6 : i32 to vector<8x16xi32>
    %50 = arith.select %46, %48, %49 : vector<8x16xi1>, vector<8x16xi32>
    %cst_7 = arith.constant dense<-2147483648> : vector<8xi32>
    %51 = vector.multi_reduction <maxsi>, %50, %cst_7 [1] : vector<8x16xi32> to vector<8xi32>
    %52 = vector.shape_cast %51 : vector<8xi32> to vector<8x1xi32>
    %53 = vector.broadcast %2 : vector<1x16xi32> to vector<8x16xi32>
    %54 = vector.broadcast %52 : vector<8x1xi32> to vector<8x16xi32>
    %55 = arith.cmpi eq, %53, %54 : vector<8x16xi32>
    %56 = vector.broadcast %c-2147483648_i32 : i32 to vector<8x16xi32>
    %57 = arith.select %55, %56, %42 : vector<8x16xi1>, vector<8x16xi32>
    %cst_8 = arith.constant dense<-2147483648> : vector<8xi32>
    %58 = vector.multi_reduction <maxsi>, %57, %cst_8 [1] : vector<8x16xi32> to vector<8xi32>
    %59 = vector.shape_cast %58 : vector<8xi32> to vector<8x1xi32>
    %60 = vector.broadcast %59 : vector<8x1xi32> to vector<8x16xi32>
    %61 = arith.cmpi eq, %57, %60 : vector<8x16xi32>
    %c-1_i32_9 = arith.constant -1 : i32
    %62 = vector.shape_cast %2 : vector<1x16xi32> to vector<1x16xi32>
    %63 = vector.broadcast %62 : vector<1x16xi32> to vector<8x16xi32>
    %64 = vector.broadcast %c-1_i32_9 : i32 to vector<8x16xi32>
    %65 = arith.select %61, %63, %64 : vector<8x16xi1>, vector<8x16xi32>
    %cst_10 = arith.constant dense<-2147483648> : vector<8xi32>
    %66 = vector.multi_reduction <maxsi>, %65, %cst_10 [1] : vector<8x16xi32> to vector<8xi32>
    %67 = vector.shape_cast %66 : vector<8xi32> to vector<8x1xi32>
    %68 = vector.broadcast %2 : vector<1x16xi32> to vector<8x16xi32>
    %69 = vector.broadcast %67 : vector<8x1xi32> to vector<8x16xi32>
    %70 = arith.cmpi eq, %68, %69 : vector<8x16xi32>
    %71 = vector.broadcast %c-2147483648_i32 : i32 to vector<8x16xi32>
    %72 = arith.select %70, %71, %57 : vector<8x16xi1>, vector<8x16xi32>
    %cst_11 = arith.constant dense<-2147483648> : vector<8xi32>
    %73 = vector.multi_reduction <maxsi>, %72, %cst_11 [1] : vector<8x16xi32> to vector<8xi32>
    %74 = vector.shape_cast %73 : vector<8xi32> to vector<8x1xi32>
    %75 = vector.broadcast %74 : vector<8x1xi32> to vector<8x16xi32>
    %76 = arith.cmpi eq, %72, %75 : vector<8x16xi32>
    %c-1_i32_12 = arith.constant -1 : i32
    %77 = vector.shape_cast %2 : vector<1x16xi32> to vector<1x16xi32>
    %78 = vector.broadcast %77 : vector<1x16xi32> to vector<8x16xi32>
    %79 = vector.broadcast %c-1_i32_12 : i32 to vector<8x16xi32>
    %80 = arith.select %76, %78, %79 : vector<8x16xi1>, vector<8x16xi32>
    %cst_13 = arith.constant dense<-2147483648> : vector<8xi32>
    %81 = vector.multi_reduction <maxsi>, %80, %cst_13 [1] : vector<8x16xi32> to vector<8xi32>
    %82 = vector.shape_cast %81 : vector<8xi32> to vector<8x1xi32>
    %83 = vector.broadcast %2 : vector<1x16xi32> to vector<8x16xi32>
    %84 = vector.broadcast %82 : vector<8x1xi32> to vector<8x16xi32>
    %85 = arith.cmpi eq, %83, %84 : vector<8x16xi32>
    %86 = vector.broadcast %c-2147483648_i32 : i32 to vector<8x16xi32>
    %87 = arith.select %85, %86, %72 : vector<8x16xi1>, vector<8x16xi32>
    %cst_14 = arith.constant dense<-2147483648> : vector<8xi32>
    %88 = vector.multi_reduction <maxsi>, %87, %cst_14 [1] : vector<8x16xi32> to vector<8xi32>
    %89 = vector.shape_cast %88 : vector<8xi32> to vector<8x1xi32>
    %90 = vector.broadcast %89 : vector<8x1xi32> to vector<8x16xi32>
    %91 = arith.cmpi eq, %87, %90 : vector<8x16xi32>
    %c-1_i32_15 = arith.constant -1 : i32
    %92 = vector.shape_cast %2 : vector<1x16xi32> to vector<1x16xi32>
    %93 = vector.broadcast %92 : vector<1x16xi32> to vector<8x16xi32>
    %94 = vector.broadcast %c-1_i32_15 : i32 to vector<8x16xi32>
    %95 = arith.select %91, %93, %94 : vector<8x16xi1>, vector<8x16xi32>
    %cst_16 = arith.constant dense<-2147483648> : vector<8xi32>
    %96 = vector.multi_reduction <maxsi>, %95, %cst_16 [1] : vector<8x16xi32> to vector<8xi32>
    %97 = vector.shape_cast %96 : vector<8xi32> to vector<8x1xi32>
    %98 = vector.broadcast %2 : vector<1x16xi32> to vector<8x16xi32>
    %99 = vector.broadcast %97 : vector<8x1xi32> to vector<8x16xi32>
    %100 = arith.cmpi eq, %98, %99 : vector<8x16xi32>
    %101 = vector.broadcast %c-2147483648_i32 : i32 to vector<8x16xi32>
    %102 = arith.select %100, %101, %87 : vector<8x16xi1>, vector<8x16xi32>
    %cst_17 = arith.constant dense<-2147483648> : vector<8xi32>
    %103 = vector.multi_reduction <maxsi>, %102, %cst_17 [1] : vector<8x16xi32> to vector<8xi32>
    %104 = vector.shape_cast %103 : vector<8xi32> to vector<8x1xi32>
    %105 = vector.broadcast %104 : vector<8x1xi32> to vector<8x16xi32>
    %106 = arith.cmpi eq, %102, %105 : vector<8x16xi32>
    %c-1_i32_18 = arith.constant -1 : i32
    %107 = vector.shape_cast %2 : vector<1x16xi32> to vector<1x16xi32>
    %108 = vector.broadcast %107 : vector<1x16xi32> to vector<8x16xi32>
    %109 = vector.broadcast %c-1_i32_18 : i32 to vector<8x16xi32>
    %110 = arith.select %106, %108, %109 : vector<8x16xi1>, vector<8x16xi32>
    %cst_19 = arith.constant dense<-2147483648> : vector<8xi32>
    %111 = vector.multi_reduction <maxsi>, %110, %cst_19 [1] : vector<8x16xi32> to vector<8xi32>
    %112 = vector.shape_cast %111 : vector<8xi32> to vector<8x1xi32>
    %113 = vector.broadcast %2 : vector<1x16xi32> to vector<8x16xi32>
    %114 = vector.broadcast %112 : vector<8x1xi32> to vector<8x16xi32>
    %115 = arith.cmpi eq, %113, %114 : vector<8x16xi32>
    %116 = vector.broadcast %c-2147483648_i32 : i32 to vector<8x16xi32>
    %117 = arith.select %115, %116, %102 : vector<8x16xi1>, vector<8x16xi32>
    %cst_20 = arith.constant dense<-2147483648> : vector<8xi32>
    %118 = vector.multi_reduction <maxsi>, %117, %cst_20 [1] : vector<8x16xi32> to vector<8xi32>
    %119 = vector.shape_cast %118 : vector<8xi32> to vector<8x1xi32>
    %120 = tpu.concatenate %14, %29, %44, %59, %74, %89, %104, %119 in 1 : vector<8x1xi32>, vector<8x1xi32>, vector<8x1xi32>, vector<8x1xi32>, vector<8x1xi32>, vector<8x1xi32>, vector<8x1xi32>, vector<8x1xi32> -> vector<8x8xi32>
    %c0_i32_21 = arith.constant 0 : i32
    %121 = vector.broadcast %c0_i32_21 : i32 to vector<8x8xi32>
    %122 = arith.cmpi slt, %120, %121 : vector<8x8xi32>
    %123 = vector.broadcast %c2147483647_i32 : i32 to vector<8x8xi32>
    %124 = arith.xori %120, %123 : vector<8x8xi32>
    %125 = arith.select %122, %124, %120 : vector<8x8xi1>, vector<8x8xi32>
    %126 = tpu.bitcast %125 : vector<8x8xi32> -> vector<8x8xf32>
    %127 = arith.index_cast %4 : i32 to index
    %c0_22 = arith.constant 0 : index
    %128 = vector.load %arg2[%127, %c0_22] : memref<8x8xf32, #tpu.memory_space<vmem>>, vector<8x8xf32>
    tpu.vector_store %arg2[%127, %c0_22], %126 {strides = array<i32>} : memref<8x8xf32, #tpu.memory_space<vmem>>, vector<8x8xf32>,
    %c1_i32 = arith.constant 1 : i32
    return
  }
  func.func @transform_0(%arg0: i32) -> (i32, i32) {
    %c0_i32 = arith.constant 0 : i32
    %c0_i32_0 = arith.constant 0 : i32
    return %arg0, %c0_i32 : i32, i32
  }
  func.func @transform_1(%arg0: i32) -> (i32, i32) {
    %c0_i32 = arith.constant 0 : i32
    %c0_i32_0 = arith.constant 0 : i32
    return %arg0, %c0_i32 : i32, i32
  }
}

</mosaic_0001>

<llo_original>
// kernel: tpu_custom_call.1
$region0: #{tpu_custom_call.1}
  #allocation0 [shape = 'u32[]', space=smem, size = 0x4, offset = 0x4, fixed_abs, tag = 'smem constant byte address 0x4 - core index']
  #allocation1 [shape = 'u32[144,128]{1,0:T(1,128)}', space=vmem, size = 0x12000, scoped, tag = 'internal scratch']
  %s0 = inlined_call_operand.hbm [shape: f32[8,16], index: 0, kind: input, shape index: {}]
  %s1 = inlined_call_operand.hbm [shape: f32[8,8], index: 1, kind: output, shape index: {}]
  %s2 = sld [smem:[#allocation0]]
  $region18: #{tpu_custom_call.1} parent=0
    _
  %s4 = ssub.s32 1, %s2
  %s5 = scalar_select 0, %s4, %s2
  $region1: #{tpu_custom_call.1} parent=0
    #allocation2 [shape = 'u8[4096]{0}', space=vmem, size = 0x1000, scoped, tag = 'input window, operand 0, single buffered']
    #allocation3 [shape = 's32[1]{0}', space=sflag, size = 0x4, scoped, tag = 'scoped memory for tpu_custom_call.1']
    #allocation4 [shape = 's32[1]{0}', space=sflag, size = 0x4, scoped, tag = 'scoped memory for tpu_custom_call.1']
    #allocation5 [shape = 'u8[4096]{0}', space=vmem, size = 0x1000, scoped, tag = 'output window, operand 0, single buffered']
    %6 = vsyncpa [#allocation3], 0
    %7 = vsyncpa [#allocation4], 0
    // Predicated region
    $region2: #{tpu_custom_call.1} parent=1 // pred_check
      _
    $region3: #{tpu_custom_call.1} parent=1 // pred_check_branch
      %9 = sbr.rel (0) target = $region5
    $region4: #{tpu_custom_call.1} parent=1 // pred_region
      %s11 = ssub.s32 128, 128
      %12 = vsyncadd [#allocation3], %s11
      %s14 = sshll.u32 [#allocation2], 4
      %s15 = int_to_ptr.vmem [resolvable:$true] %s14
      %17 = dma.hbm_to_vmem [thread:$0]  %s0, 128, %s15, [#allocation3]
    $region5: #{tpu_custom_call.1} parent=1 // pred_fallthru
      _
    // Predicated region
    $region6: #{tpu_custom_call.1} parent=1 // pred_check
      _
    $region7: #{tpu_custom_call.1} parent=1 // pred_check_branch
      %19 = sbr.rel (0) target = $region9
    $region8: #{tpu_custom_call.1} parent=1 // pred_region
      %20 = dma.done [#allocation3], 128
    $region9: #{tpu_custom_call.1} parent=1 // pred_fallthru
      _
    %v21 = vlaneseq
    %v22 = vand.u32 %v21, 127
    %v23 = vsub.s32 15, %v22
    %v24 = vld [vmem:[#allocation2] sm:$0xff]
    %vm26 = vcmp.lt.s32.totalorder %v24, 0
    %v27 = vxor.u32 %v24, 2147483647
    %v28 = vsel %vm26, %v27, %v24
    %vm29 = vcmask 130048
    %v30 = vsel %vm29, %v28, 2147483648
    %v31 = vand.u32 %v30, 65535
    %v32 = vshra.s32 %v30, 16
    %v33 = vcvt.s32.f32 %v31
    %v34 = vcvt.s32.f32 %v32
    %35 = vmax.xlane.f32.xlu0 %v34
    %v36 = vpop.xlane.xlu0 %35
    %vm37 = vcmp.eq.f32.partialorder %v34, %v36
    %v38 = vsel %vm37, %v33, -inf
    %39 = vmax.xlane.f32.xlu0 %v38
    %v40 = vpop.xlane.xlu0 %39
    %v41 = vcvt.f32.s32 %v40
    %v42 = vcvt.f32.s32 %v36
    %v43 = vshll.u32 %v42, 16
    %v44 = vadd.s32 %v43, %v41
    %vm45 = vcmp.eq.s32.totalorder %v28, %v44
    %v46 = vsel %vm45, %v23, 4294967295
    %v47 = vsel %vm29, %v46, 2147483648
    %v48 = vand.u32 %v47, 65535
    %v49 = vshra.s32 %v47, 16
    %v50 = vcvt.s32.f32 %v48
    %v51 = vcvt.s32.f32 %v49
    %52 = vmax.xlane.f32.xlu0 %v51
    %v53 = vpop.xlane.xlu0 %52
    %vm54 = vcmp.eq.f32.partialorder %v51, %v53
    %v55 = vsel %vm54, %v50, -inf
    %56 = vmax.xlane.f32.xlu0 %v55
    %v57 = vpop.xlane.xlu0 %56
    %v58 = vcvt.f32.s32 %v57
    %v59 = vcvt.f32.s32 %v53
    %v60 = vshll.u32 %v59, 16
    %v61 = vadd.s32 %v60, %v58
    %vm62 = vcmp.eq.s32.totalorder %v23, %v61
    %v63 = vsel %vm62, 2147483648, %v28
    %v64 = vsel %vm29, %v63, 2147483648
    %v65 = vand.u32 %v64, 65535
    %v66 = vshra.s32 %v64, 16
    %v67 = vcvt.s32.f32 %v65
    %v68 = vcvt.s32.f32 %v66
    %69 = vmax.xlane.f32.xlu0 %v68
    %v70 = vpop.xlane.xlu0 %69
    %vm71 = vcmp.eq.f32.partialorder %v68, %v70
    %v72 = vsel %vm71, %v67, -inf
    %73 = vmax.xlane.f32.xlu0 %v72
    %v74 = vpop.xlane.xlu0 %73
    %v75 = vcvt.f32.s32 %v74
    %v76 = vcvt.f32.s32 %v70
    %v77 = vshll.u32 %v76, 16
    %v78 = vadd.s32 %v77, %v75
    %vm79 = vcmp.eq.s32.totalorder %v63, %v78
    %v80 = vsel %vm79, %v23, 4294967295
    %v81 = vsel %vm29, %v80, 2147483648
    %v82 = vand.u32 %v81, 65535
    %v83 = vshra.s32 %v81, 16
    %v84 = vcvt.s32.f32 %v82
    %v85 = vcvt.s32.f32 %v83
    %86 = vmax.xlane.f32.xlu0 %v85
    %v87 = vpop.xlane.xlu0 %86
    %vm88 = vcmp.eq.f32.partialorder %v85, %v87
    %v89 = vsel %vm88, %v84, -inf
    %90 = vmax.xlane.f32.xlu0 %v89
    %v91 = vpop.xlane.xlu0 %90
    %v92 = vcvt.f32.s32 %v91
    %v93 = vcvt.f32.s32 %v87
    %v94 = vshll.u32 %v93, 16
    %v95 = vadd.s32 %v94, %v92
    %vm96 = vcmp.eq.s32.totalorder %v23, %v95
    %v97 = vsel %vm96, 2147483648, %v63
    %v98 = vsel %vm29, %v97, 2147483648
    %v99 = vand.u32 %v98, 65535
    %v100 = vshra.s32 %v98, 16
    %v101 = vcvt.s32.f32 %v99
    %v102 = vcvt.s32.f32 %v100
    %103 = vmax.xlane.f32.xlu0 %v102
    %v104 = vpop.xlane.xlu0 %103
    %vm105 = vcmp.eq.f32.partialorder %v102, %v104
    %v106 = vsel %vm105, %v101, -inf
    %107 = vmax.xlane.f32.xlu0 %v106
    %v108 = vpop.xlane.xlu0 %107
    %v109 = vcvt.f32.s32 %v108
    %v110 = vcvt.f32.s32 %v104
    %v111 = vshll.u32 %v110, 16
    %v112 = vadd.s32 %v111, %v109
    %vm113 = vcmp.eq.s32.totalorder %v97, %v112
    %v114 = vsel %vm113, %v23, 4294967295
    %v115 = vsel %vm29, %v114, 2147483648
    %v116 = vand.u32 %v115, 65535
    %v117 = vshra.s32 %v115, 16
    %v118 = vcvt.s32.f32 %v116
    %v119 = vcvt.s32.f32 %v117
    %120 = vmax.xlane.f32.xlu0 %v119
    %v121 = vpop.xlane.xlu0 %120
    %vm122 = vcmp.eq.f32.partialorder %v119, %v121
    %v123 = vsel %vm122, %v118, -inf
    %124 = vmax.xlane.f32.xlu0 %v123
    %v125 = vpop.xlane.xlu0 %124
    %v126 = vcvt.f32.s32 %v125
    %v127 = vcvt.f32.s32 %v121
    %v128 = vshll.u32 %v127, 16
    %v129 = vadd.s32 %v128, %v126
    %vm130 = vcmp.eq.s32.totalorder %v23, %v129
    %v131 = vsel %vm130, 2147483648, %v97
    %v132 = vsel %vm29, %v131, 2147483648
    %v133 = vand.u32 %v132, 65535
    %v134 = vshra.s32 %v132, 16
    %v135 = vcvt.s32.f32 %v133
    %v136 = vcvt.s32.f32 %v134
    %137 = vmax.xlane.f32.xlu0 %v136
    %v138 = vpop.xlane.xlu0 %137
    %vm139 = vcmp.eq.f32.partialorder %v136, %v138
    %v140 = vsel %vm139, %v135, -inf
    %141 = vmax.xlane.f32.xlu0 %v140
    %v142 = vpop.xlane.xlu0 %141
    %v143 = vcvt.f32.s32 %v142
    %v144 = vcvt.f32.s32 %v138
    %v145 = vshll.u32 %v144, 16
    %v146 = vadd.s32 %v145, %v143
    %vm147 = vcmp.eq.s32.totalorder %v131, %v146
    %v148 = vsel %vm147, %v23, 4294967295
    %v149 = vsel %vm29, %v148, 2147483648
    %v150 = vand.u32 %v149, 65535
    %v151 = vshra.s32 %v149, 16
    %v152 = vcvt.s32.f32 %v150
    %v153 = vcvt.s32.f32 %v151
    %154 = vmax.xlane.f32.xlu0 %v153
    %v155 = vpop.xlane.xlu0 %154
    %vm156 = vcmp.eq.f32.partialorder %v153, %v155
    %v157 = vsel %vm156, %v152, -inf
    %158 = vmax.xlane.f32.xlu0 %v157
    %v159 = vpop.xlane.xlu0 %158
    %v160 = vcvt.f32.s32 %v159
    %v161 = vcvt.f32.s32 %v155
    %v162 = vshll.u32 %v161, 16
    %v163 = vadd.s32 %v162, %v160
    %vm164 = vcmp.eq.s32.totalorder %v23, %v163
    %v165 = vsel %vm164, 2147483648, %v131
    %v166 = vsel %vm29, %v165, 2147483648
    %v167 = vand.u32 %v166, 65535
    %v168 = vshra.s32 %v166, 16
    %v169 = vcvt.s32.f32 %v167
    %v170 = vcvt.s32.f32 %v168
    %171 = vmax.xlane.f32.xlu0 %v170
    %v172 = vpop.xlane.xlu0 %171
    %vm173 = vcmp.eq.f32.partialorder %v170, %v172
    %v174 = vsel %vm173, %v169, -inf
    %175 = vmax.xlane.f32.xlu0 %v174
    %v176 = vpop.xlane.xlu0 %175
    %v177 = vcvt.f32.s32 %v176
    %v178 = vcvt.f32.s32 %v172
    %v179 = vshll.u32 %v178, 16
    %v180 = vadd.s32 %v179, %v177
    %vm181 = vcmp.eq.s32.totalorder %v165, %v180
    %v182 = vsel %vm181, %v23, 4294967295
    %v183 = vsel %vm29, %v182, 2147483648
    %v184 = vand.u32 %v183, 65535
    %v185 = vshra.s32 %v183, 16
    %v186 = vcvt.s32.f32 %v184
    %v187 = vcvt.s32.f32 %v185
    %188 = vmax.xlane.f32.xlu0 %v187
    %v189 = vpop.xlane.xlu0 %188
    %vm190 = vcmp.eq.f32.partialorder %v187, %v189
    %v191 = vsel %vm190, %v186, -inf
    %192 = vmax.xlane.f32.xlu0 %v191
    %v193 = vpop.xlane.xlu0 %192
    %v194 = vcvt.f32.s32 %v193
    %v195 = vcvt.f32.s32 %v189
    %v196 = vshll.u32 %v195, 16
    %v197 = vadd.s32 %v196, %v194
    %vm198 = vcmp.eq.s32.totalorder %v23, %v197
    %v199 = vsel %vm198, 2147483648, %v165
    %v200 = vsel %vm29, %v199, 2147483648
    %v201 = vand.u32 %v200, 65535
    %v202 = vshra.s32 %v200, 16
    %v203 = vcvt.s32.f32 %v201
    %v204 = vcvt.s32.f32 %v202
    %205 = vmax.xlane.f32.xlu0 %v204
    %v206 = vpop.xlane.xlu0 %205
    %vm207 = vcmp.eq.f32.partialorder %v204, %v206
    %v208 = vsel %vm207, %v203, -inf
    %209 = vmax.xlane.f32.xlu0 %v208
    %v210 = vpop.xlane.xlu0 %209
    %v211 = vcvt.f32.s32 %v210
    %v212 = vcvt.f32.s32 %v206
    %v213 = vshll.u32 %v212, 16
    %v214 = vadd.s32 %v213, %v211
    %vm215 = vcmp.eq.s32.totalorder %v199, %v214
    %v216 = vsel %vm215, %v23, 4294967295
    %v217 = vsel %vm29, %v216, 2147483648
    %v218 = vand.u32 %v217, 65535
    %v219 = vshra.s32 %v217, 16
    %v220 = vcvt.s32.f32 %v218
    %v221 = vcvt.s32.f32 %v219
    %222 = vmax.xlane.f32.xlu0 %v221
    %v223 = vpop.xlane.xlu0 %222
    %vm224 = vcmp.eq.f32.partialorder %v221, %v223
    %v225 = vsel %vm224, %v220, -inf
    %226 = vmax.xlane.f32.xlu0 %v225
    %v227 = vpop.xlane.xlu0 %226
    %v228 = vcvt.f32.s32 %v227
    %v229 = vcvt.f32.s32 %v223
    %v230 = vshll.u32 %v229, 16
    %v231 = vadd.s32 %v230, %v228
    %vm232 = vcmp.eq.s32.totalorder %v23, %v231
    %v233 = vsel %vm232, 2147483648, %v199
    %v234 = vsel %vm29, %v233, 2147483648
    %v235 = vand.u32 %v234, 65535
    %v236 = vshra.s32 %v234, 16
    %v237 = vcvt.s32.f32 %v235
    %v238 = vcvt.s32.f32 %v236
    %239 = vmax.xlane.f32.xlu0 %v238
    %v240 = vpop.xlane.xlu0 %239
    %vm241 = vcmp.eq.f32.partialorder %v238, %v240
    %v242 = vsel %vm241, %v237, -inf
    %243 = vmax.xlane.f32.xlu0 %v242
    %v244 = vpop.xlane.xlu0 %243
    %v245 = vcvt.f32.s32 %v244
    %v246 = vcvt.f32.s32 %v240
    %v247 = vshll.u32 %v246, 16
    %v248 = vadd.s32 %v247, %v245
    %vm249 = vcmp.eq.s32.totalorder %v233, %v248
    %v250 = vsel %vm249, %v23, 4294967295
    %v251 = vsel %vm29, %v250, 2147483648
    %v252 = vand.u32 %v251, 65535
    %v253 = vshra.s32 %v251, 16
    %v254 = vcvt.s32.f32 %v252
    %v255 = vcvt.s32.f32 %v253
    %256 = vmax.xlane.f32.xlu0 %v255
    %v257 = vpop.xlane.xlu0 %256
    %vm258 = vcmp.eq.f32.partialorder %v255, %v257
    %v259 = vsel %vm258, %v254, -inf
    %260 = vmax.xlane.f32.xlu0 %v259
    %v261 = vpop.xlane.xlu0 %260
    %v262 = vcvt.f32.s32 %v261
    %v263 = vcvt.f32.s32 %v257
    %v264 = vshll.u32 %v263, 16
    %v265 = vadd.s32 %v264, %v262
    %vm266 = vcmp.eq.s32.totalorder %v23, %v265
    %v267 = vsel %vm266, 2147483648, %v233
    %v268 = vsel %vm29, %v267, 2147483648
    %v269 = vand.u32 %v268, 65535
    %v270 = vshra.s32 %v268, 16
    %v271 = vcvt.s32.f32 %v269
    %v272 = vcvt.s32.f32 %v270
    %273 = vmax.xlane.f32.xlu0 %v272
    %v274 = vpop.xlane.xlu0 %273
    %vm275 = vcmp.eq.f32.partialorder %v272, %v274
    %v276 = vsel %vm275, %v271, -inf
    %277 = vmax.xlane.f32.xlu0 %v276
    %v278 = vpop.xlane.xlu0 %277
    %v279 = vcvt.f32.s32 %v278
    %v280 = vcvt.f32.s32 %v274
    %v281 = vshll.u32 %v280, 16
    %v282 = vadd.s32 %v281, %v279
    %vm283 = vcmask 7168
    %v284 = vsel %vm283, %v44, %v78
    %vm285 = vcmask 15360
    %v286 = vsel %vm285, %v284, %v112
    %vm287 = vcmask 23552
    %v288 = vsel %vm287, %v286, %v146
    %vm289 = vcmask 31744
    %v290 = vsel %vm289, %v288, %v180
    %vm291 = vcmask 39936
    %v292 = vsel %vm291, %v290, %v214
    %vm293 = vcmask 48128
    %v294 = vsel %vm293, %v292, %v248
    %vm295 = vcmask 56320
    %v296 = vsel %vm295, %v294, %v282
    %vm297 = vcmp.lt.s32.totalorder %v296, 0
    %v298 = vxor.u32 %v296, 2147483647
    %v299 = vsel %vm297, %v298, %v296
    %vm301 = vcmask 64512
    %302 = vst.msk [vmem:[#allocation5] sm:$0xff] %vm301, %v299
    // Predicated region
    $region10: #{tpu_custom_call.1} parent=1 // pred_check
      _
    $region11: #{tpu_custom_call.1} parent=1 // pred_check_branch
      %304 = sbr.rel (0) target = $region13
    $region12: #{tpu_custom_call.1} parent=1 // pred_region
      %s306 = ssub.s32 128, 128
      %307 = vsyncadd [#allocation4], %s306
      %s309 = sshll.u32 [#allocation5], 4
      %s310 = int_to_ptr.vmem [resolvable:$true] %s309
      %312 = dma.vmem_to_hbm [thread:$0]  %s310, 128, %s1, [#allocation4]
    $region13: #{tpu_custom_call.1} parent=1 // pred_fallthru
      _
    // Predicated region
    $region14: #{tpu_custom_call.1} parent=1 // pred_check
      _
    $region15: #{tpu_custom_call.1} parent=1 // pred_check_branch
      %314 = sbr.rel (0) target = $region17
    $region16: #{tpu_custom_call.1} parent=1 // pred_region
      %315 = dma.done [#allocation4], 128
    $region17: #{tpu_custom_call.1} parent=1 // pred_fallthru
      _
    %316 = vsyncpa [#allocation3], 1
    %317 = vsyncpa [#allocation4], 1

</llo_original>
